<compile_context>
chip_gen: v7x
topology: tpu7x:2x2x1
jax: 0.10.0
libtpu: 0.0.40
codegen_flags: <defaults>
</compile_context>

<pallas_src>
import jax
import jax.numpy as jnp
from jax.experimental import pallas as pl
from jax.experimental.pallas import tpu as pltpu

# ----------------------------- problem sizes -------------------------------
S_DIM = 8         # state dim
H_DIM = 32        # hidden dim
A_DIM = 4         # action dim
NUM_LAYERS = 2    # number of hidden fc_n layers

# ----------------------------- padded layout --------------------------------
PAD = 128                       # lane width for hidden activations / weight slots
NUM_MATS = NUM_LAYERS + 2       # fc_in, fc_n[0..L-1], fc_out
BIAS_ROW0 = NUM_MATS * PAD      # row offset of the bias block inside the slab
SLAB_ROWS = BIAS_ROW0 + 8       # bias block padded to one (8,128) tile


# ------------------------------- kernel ------------------------------------
def localnet_kernel(x_ref, slab_ref, o_ref):
    # x_ref:    (BLK, S_DIM)      un-padded f32 states
    # slab_ref: (SLAB_ROWS, PAD)  packed f32 weights + biases (see pack_params)
    # o_ref:    (BLK, A_DIM)      per-row action probabilities
    biases = slab_ref[pl.ds(BIAS_ROW0, 8), :]              # (8, PAD) one tile

    h = x_ref[...]                                          # (BLK, S_DIM) f32
    for layer in range(NUM_MATS):                           # static unroll (4 layers)
        if layer == 0:
            w = slab_ref[pl.ds(0, S_DIM), :]                # (S_DIM, PAD)  K=8 matmul
        else:
            w = slab_ref[pl.ds(layer * PAD, PAD), :]        # (PAD, PAD) tile-aligned
        b = biases[layer:layer + 1, :]                      # (1, PAD) lane-aligned bias
        # bf16 MXU operands, f32 accumulation; bias add / ReLU stay f32 (v5e-safe).
        h = jnp.dot(h.astype(jnp.bfloat16), w.astype(jnp.bfloat16),
                    preferred_element_type=jnp.float32) + b
        if layer < NUM_MATS - 1:
            h = jnp.maximum(h, 0.0)

    # Softmax over the real action lanes only (f32 throughout, exact normalization).
    logits = h[:, :A_DIM]                                   # (BLK, A_DIM)
    m = jnp.max(logits, axis=-1, keepdims=True)
    e = jnp.exp(logits - m)
    o_ref[...] = e / jnp.sum(e, axis=-1, keepdims=True)


# --------------------------- parameter packing -------------------------------
def pack_params(params):
    """Pack all layer weights/biases into one pre-padded (SLAB_ROWS, 128) f32 slab.

    Row layout (each weight gets a tile-aligned 128-row slot):
      [        0 : 128 )   fc_in  weight, real data in [0:S_DIM, 0:H_DIM]
      [(1+i)*128 : ...  )  fc_n[i] weight, real data in [0:H_DIM, 0:H_DIM]
      [(1+L)*128 : ...  )  fc_out weight, real data in [0:H_DIM, 0:A_DIM]
      [BIAS_ROW0 + 0    ]  fc_in  bias (lanes 0:H_DIM)
      [BIAS_ROW0 + 1+i  ]  fc_n[i] bias (lanes 0:H_DIM)
      [BIAS_ROW0 + 1+L  ]  fc_out bias (lanes 0:A_DIM)
    """
    w_in, b_in, w_hid, b_hid, w_out, b_out = params
    slab = jnp.zeros((SLAB_ROWS, PAD), jnp.float32)

    slab = slab.at[0:S_DIM, 0:H_DIM].set(w_in)
    for i in range(NUM_LAYERS):
        r0 = (1 + i) * PAD
        slab = slab.at[r0:r0 + H_DIM, 0:H_DIM].set(w_hid[i])
    r_out = (1 + NUM_LAYERS) * PAD
    slab = slab.at[r_out:r_out + H_DIM, 0:A_DIM].set(w_out)

    slab = slab.at[BIAS_ROW0, 0:H_DIM].set(b_in)
    for i in range(NUM_LAYERS):
        slab = slab.at[BIAS_ROW0 + 1 + i, 0:H_DIM].set(b_hid[i])
    slab = slab.at[BIAS_ROW0 + 1 + NUM_LAYERS, 0:A_DIM].set(b_out)
    return slab


# ------------------------------- wrappers ------------------------------------
def _choose_block(B):
    """Adaptive batch tile: big tiles for throughput, >=2 grid steps for v7x dual-TC,
    8-row minimum tile for the tiny single-state RL path."""
    if B >= 1024:
        return 512
    if B >= 256:
        return 128
    if B >= 64:
        return 32
    return 8


def localnet_forward_batch(states, slab):
    """states: (B, S_DIM) f32. Returns per-state action probabilities (B, A_DIM)."""
    states = jnp.asarray(states, jnp.float32)
    B = states.shape[0]
    blk = _choose_block(B)
    b_pad = pl.cdiv(B, blk) * blk
    x = jnp.zeros((b_pad, S_DIM), jnp.float32).at[:B].set(states)

    out = pl.pallas_call(
        localnet_kernel,
        out_shape=jax.ShapeDtypeStruct((b_pad, A_DIM), jnp.float32),
        grid_spec=pltpu.PrefetchScalarGridSpec(
            num_scalar_prefetch=0,
            grid=(b_pad // blk,),
            in_specs=[
                # un-padded states: last dim == full array dim (legal), 16x less DMA
                pl.BlockSpec((blk, S_DIM), lambda i: (i, 0)),
                # resident parameter slab (constant index_map -> fetched once)
                pl.BlockSpec((SLAB_ROWS, PAD), lambda i: (0, 0)),
            ],
            # narrow lane-sparse output: last dim == full array dim (legal)
            out_specs=pl.BlockSpec((blk, A_DIM), lambda i: (i, 0)),
        ),
        compiler_params=pltpu.CompilerParams(
            dimension_semantics=("parallel",)),        # both TCs on v7x when grid >= 2
    )(x, slab)
    return out[:B]


def localnet_forward(state, slab):
    """Original single-state API: state (S_DIM,) -> softmax action probs (A_DIM,)."""
    return localnet_forward_batch(jnp.asarray(state, jnp.float32).reshape(1, S_DIM),
                                  slab)[0]


# --------------------------- parameter init ---------------------------------
def init_params(key):
    """PyTorch-Linear-style init: U(-1/sqrt(fan_in), +1/sqrt(fan_in)).
    Weights stored pre-transposed as (in, out) relative to torch's (out, in)."""
    ks = jax.random.split(key, 6)

    def lin(kw, kb, fan_in, fan_out):
        bound = 1.0 / jnp.sqrt(jnp.float32(fan_in))
        w = jax.random.uniform(kw, (fan_in, fan_out), jnp.float32, -bound, bound)
        b = jax.random.uniform(kb, (fan_out,), jnp.float32, -bound, bound)
        return w, b

    w_in, b_in = lin(ks[0], ks[1], S_DIM, H_DIM)

    hid_keys = jax.random.split(ks[2], 2 * NUM_LAYERS)
    w_hid_list, b_hid_list = [], []
    for i in range(NUM_LAYERS):
        w, b = lin(hid_keys[2 * i], hid_keys[2 * i + 1], H_DIM, H_DIM)
        w_hid_list.append(w)
        b_hid_list.append(b)
    w_hid = jnp.stack(w_hid_list, axis=0)          # (L, H, H)
    b_hid = jnp.stack(b_hid_list, axis=0)          # (L, H)

    w_out, b_out = lin(ks[3], ks[4], H_DIM, A_DIM)
    return (w_in, b_in, w_hid, b_hid, w_out, b_out)


# ------------------------------ reference -----------------------------------
def localnet_ref(states, params, matmul_dtype=jnp.float32):
    """Pure-JAX reference. matmul_dtype=bfloat16 mimics the kernel's MXU casts
    (operands bf16, accumulation f32); everything else stays f32."""
    w_in, b_in, w_hid, b_hid, w_out, b_out = params

    def mm(a, w):
        return jnp.dot(a.astype(matmul_dtype), w.astype(matmul_dtype),
                       preferred_element_type=jnp.float32)

    h = jnp.maximum(mm(states, w_in) + b_in, 0.0)
    for i in range(NUM_LAYERS):
        h = jnp.maximum(mm(h, w_hid[i]) + b_hid[i], 0.0)
    logits = mm(h, w_out) + b_out
    return jax.nn.softmax(logits, axis=-1)


# -------------------------------- main ---------------------------------------
if __name__ == "__main__":
    key = jax.random.PRNGKey(0)
    k_param, k_state = jax.random.split(key)

    params = init_params(k_param)
    slab = pack_params(params)                       # built once, reused every call

    # ---- small batch of RL env states (tiny-batch path: 8-row tiles) ----
    B = 8
    states = jax.random.normal(k_state, (B, S_DIM), jnp.float32)

    out_b = jax.block_until_ready(localnet_forward_batch(states, slab))
    ref_bf16 = localnet_ref(states, params, jnp.bfloat16)   # same matmul precision
    ref_f32 = localnet_ref(states, params, jnp.float32)     # full-precision spec
    assert out_b.shape == (B, A_DIM)
    assert jnp.allclose(out_b, ref_bf16, atol=1e-4, rtol=1e-4), (out_b, ref_bf16)
    assert jnp.allclose(out_b, ref_f32, atol=2e-2, rtol=2e-2), (out_b, ref_f32)
    # exact normalization now -> rows sum to 1 to f32 rounding
    assert jnp.allclose(jnp.sum(out_b, axis=-1), 1.0, atol=1e-5)

    # ---- original single-state API ----
    out_1 = jax.block_until_ready(localnet_forward(states[0], slab))
    assert out_1.shape == (A_DIM,)
    assert jnp.allclose(out_1, ref_f32[0], atol=2e-2, rtol=2e-2), (out_1, ref_f32[0])
    assert jnp.allclose(jnp.sum(out_1), 1.0, atol=1e-5)

    # ---- medium batch exercising a multi-step parallel grid ----
    B2 = 160
    states2 = jax.random.normal(jax.random.PRNGKey(1), (B2, S_DIM), jnp.float32)
    out_2 = jax.block_until_ready(localnet_forward_batch(states2, slab))
    ref_2 = localnet_ref(states2, params, jnp.bfloat16)
    assert out_2.shape == (B2, A_DIM)
    assert jnp.allclose(out_2, ref_2, atol=1e-4, rtol=1e-4)
    assert jnp.allclose(jnp.sum(out_2, axis=-1), 1.0, atol=1e-5)

    print("KERNEL_OK")
</pallas_src>

<mosaic_0001>
module attributes {stable_mosaic.version = 11 : i64} {
  func.func @localnet_kernel(%arg0: i32, %arg1: memref<8x8xf32, #tpu.memory_space<vmem>>, %arg2: memref<520x128xf32, #tpu.memory_space<vmem>>, %arg3: memref<8x4xf32, #tpu.memory_space<vmem>>) attributes {dimension_semantics = [#tpu.dimension_semantics<parallel>], iteration_bounds = array<i64: 1>, scalar_prefetch = 0 : i64, scratch_operands = 0 : i64, tpu.core_type = #tpu.core_type<tc>, window_params = [{transform_indices = @transform_0, window_bounds = array<i64: 8, 8>}, {pipeline_mode = #tpu.pipeline_mode<synchronous>, transform_indices = @transform_1, window_bounds = array<i64: 520, 128>}, {transform_indices = @transform_2, window_bounds = array<i64: 8, 4>}]} {
    %c512 = arith.constant 512 : index
    %c0 = arith.constant 0 : index
    %0 = vector.load %arg2[%c512, %c0] : memref<520x128xf32, #tpu.memory_space<vmem>>, vector<8x128xf32>
    %c0_0 = arith.constant 0 : index
    %c0_1 = arith.constant 0 : index
    %1 = vector.load %arg1[%c0_0, %c0_1] : memref<8x8xf32, #tpu.memory_space<vmem>>, vector<8x8xf32>
    %c0_2 = arith.constant 0 : index
    %c0_3 = arith.constant 0 : index
    %2 = vector.load %arg2[%c0_2, %c0_3] : memref<520x128xf32, #tpu.memory_space<vmem>>, vector<8x128xf32>
    %3 = vector.extract_strided_slice %0 {offsets = [0, 0], sizes = [1, 128], strides = [1, 1]} : vector<8x128xf32> to vector<1x128xf32>
    %4 = arith.truncf %1 : vector<8x8xf32> to vector<8x8xbf16>
    %5 = arith.truncf %2 : vector<8x128xf32> to vector<8x128xbf16>
    %cst = arith.constant dense<0.000000e+00> : vector<8x128xf32>
    %6 = tpu.matmul %4, %5, %cst {dimension_numbers = #tpu.dot_dimension_numbers<[1], [0], [0], [1], [0, 0, 1, 1], [], []>} : vector<8x8xbf16>, vector<8x128xbf16>, vector<8x128xf32> -> vector<8x128xf32>
    %7 = vector.broadcast %3 : vector<1x128xf32> to vector<8x128xf32>
    %8 = arith.addf %6, %7 : vector<8x128xf32>
    %cst_4 = arith.constant 0.000000e+00 : f32
    %9 = vector.broadcast %cst_4 : f32 to vector<8x128xf32>
    %10 = arith.maximumf %8, %9 : vector<8x128xf32>
    %c128 = arith.constant 128 : index
    %c0_5 = arith.constant 0 : index
    %11 = vector.load %arg2[%c128, %c0_5] : memref<520x128xf32, #tpu.memory_space<vmem>>, vector<128x128xf32>
    %12 = vector.extract_strided_slice %0 {offsets = [1, 0], sizes = [1, 128], strides = [1, 1]} : vector<8x128xf32> to vector<1x128xf32>
    %13 = arith.truncf %10 : vector<8x128xf32> to vector<8x128xbf16>
    %14 = arith.truncf %11 : vector<128x128xf32> to vector<128x128xbf16>
    %cst_6 = arith.constant dense<0.000000e+00> : vector<8x128xf32>
    %15 = tpu.matmul %13, %14, %cst_6 {dimension_numbers = #tpu.dot_dimension_numbers<[1], [0], [0], [1], [0, 0, 1, 1], [], []>} : vector<8x128xbf16>, vector<128x128xbf16>, vector<8x128xf32> -> vector<8x128xf32>
    %16 = vector.broadcast %12 : vector<1x128xf32> to vector<8x128xf32>
    %17 = arith.addf %15, %16 : vector<8x128xf32>
    %cst_7 = arith.constant 0.000000e+00 : f32
    %18 = vector.broadcast %cst_7 : f32 to vector<8x128xf32>
    %19 = arith.maximumf %17, %18 : vector<8x128xf32>
    %c256 = arith.constant 256 : index
    %c0_8 = arith.constant 0 : index
    %20 = vector.load %arg2[%c256, %c0_8] : memref<520x128xf32, #tpu.memory_space<vmem>>, vector<128x128xf32>
    %21 = vector.extract_strided_slice %0 {offsets = [2, 0], sizes = [1, 128], strides = [1, 1]} : vector<8x128xf32> to vector<1x128xf32>
    %22 = arith.truncf %19 : vector<8x128xf32> to vector<8x128xbf16>
    %23 = arith.truncf %20 : vector<128x128xf32> to vector<128x128xbf16>
    %cst_9 = arith.constant dense<0.000000e+00> : vector<8x128xf32>
    %24 = tpu.matmul %22, %23, %cst_9 {dimension_numbers = #tpu.dot_dimension_numbers<[1], [0], [0], [1], [0, 0, 1, 1], [], []>} : vector<8x128xbf16>, vector<128x128xbf16>, vector<8x128xf32> -> vector<8x128xf32>
    %25 = vector.broadcast %21 : vector<1x128xf32> to vector<8x128xf32>
    %26 = arith.addf %24, %25 : vector<8x128xf32>
    %cst_10 = arith.constant 0.000000e+00 : f32
    %27 = vector.broadcast %cst_10 : f32 to vector<8x128xf32>
    %28 = arith.maximumf %26, %27 : vector<8x128xf32>
    %c384 = arith.constant 384 : index
    %c0_11 = arith.constant 0 : index
    %29 = vector.load %arg2[%c384, %c0_11] : memref<520x128xf32, #tpu.memory_space<vmem>>, vector<128x128xf32>
    %30 = vector.extract_strided_slice %0 {offsets = [3, 0], sizes = [1, 128], strides = [1, 1]} : vector<8x128xf32> to vector<1x128xf32>
    %31 = arith.truncf %28 : vector<8x128xf32> to vector<8x128xbf16>
    %32 = arith.truncf %29 : vector<128x128xf32> to vector<128x128xbf16>
    %cst_12 = arith.constant dense<0.000000e+00> : vector<8x128xf32>
    %33 = tpu.matmul %31, %32, %cst_12 {dimension_numbers = #tpu.dot_dimension_numbers<[1], [0], [0], [1], [0, 0, 1, 1], [], []>} : vector<8x128xbf16>, vector<128x128xbf16>, vector<8x128xf32> -> vector<8x128xf32>
    %34 = vector.broadcast %30 : vector<1x128xf32> to vector<8x128xf32>
    %35 = arith.addf %33, %34 : vector<8x128xf32>
    %36 = vector.extract_strided_slice %35 {offsets = [0, 0], sizes = [8, 4], strides = [1, 1]} : vector<8x128xf32> to vector<8x4xf32>
    %cst_13 = arith.constant dense<0xFF800000> : vector<8xf32>
    %37 = vector.multi_reduction <maximumf>, %36, %cst_13 [1] : vector<8x4xf32> to vector<8xf32>
    %38 = vector.shape_cast %37 : vector<8xf32> to vector<8x1xf32>
    %39 = vector.broadcast %38 : vector<8x1xf32> to vector<8x4xf32>
    %40 = arith.subf %36, %39 : vector<8x4xf32>
    %41 = math.exp %40 : vector<8x4xf32>
    %cst_14 = arith.constant dense<0.000000e+00> : vector<8xf32>
    %42 = vector.multi_reduction <add>, %41, %cst_14 [1] : vector<8x4xf32> to vector<8xf32>
    %43 = vector.shape_cast %42 : vector<8xf32> to vector<8x1xf32>
    %44 = vector.broadcast %43 : vector<8x1xf32> to vector<8x4xf32>
    %45 = arith.divf %41, %44 : vector<8x4xf32>
    %c0_15 = arith.constant 0 : index
    %c0_16 = arith.constant 0 : index
    %46 = vector.load %arg3[%c0_15, %c0_16] : memref<8x4xf32, #tpu.memory_space<vmem>>, vector<8x4xf32>
    tpu.vector_store %arg3[%c0_15, %c0_16], %45 {strides = array<i32>} : memref<8x4xf32, #tpu.memory_space<vmem>>, vector<8x4xf32>,
    return
  }
  func.func @transform_0(%arg0: i32) -> (i32, i32) {
    %c0_i32 = arith.constant 0 : i32
    %c0_i32_0 = arith.constant 0 : i32
    return %arg0, %c0_i32 : i32, i32
  }
  func.func @transform_1(%arg0: i32) -> (i32, i32) {
    %c0_i32 = arith.constant 0 : i32
    %c0_i32_0 = arith.constant 0 : i32
    %c0_i32_1 = arith.constant 0 : i32
    return %c0_i32, %c0_i32_0 : i32, i32
  }
  func.func @transform_2(%arg0: i32) -> (i32, i32) {
    %c0_i32 = arith.constant 0 : i32
    %c0_i32_0 = arith.constant 0 : i32
    return %arg0, %c0_i32 : i32, i32
  }
}

</mosaic_0001>

<llo_original>
// kernel: tpu_custom_call.1
$region0: #{tpu_custom_call.1}
  #allocation0 [shape = 'u32[]', space=smem, size = 0x4, offset = 0x4, fixed_abs, tag = 'smem constant byte address 0x4 - core index']
  #allocation1 [shape = 'u32[144,128]{1,0:T(1,128)}', space=vmem, size = 0x12000, scoped, tag = 'internal scratch']
  %s0 = inlined_call_operand.hbm [shape: f32[8,8], index: 0, kind: input, shape index: {}]
  %s1 = inlined_call_operand.hbm [shape: f32[520,128], index: 1, kind: input, shape index: {}]
  %s2 = inlined_call_operand.vmem [shape: f32[8,4], index: 2, kind: output, shape index: {}]
  %s3 = sld [smem:[#allocation0]]
  $region26: #{tpu_custom_call.1} parent=0
    _
  %s5 = ssub.s32 1, %s3
  %s6 = scalar_select 0, %s5, %s3
  $region1: #{tpu_custom_call.1} parent=0
    #allocation2 [shape = 'u8[4096]{0}', space=vmem, size = 0x1000, scoped, tag = 'input window, operand 0, single buffered']
    #allocation3 [shape = 's32[1]{0}', space=sflag, size = 0x4, scoped, tag = 'scoped memory for tpu_custom_call.1']
    #allocation4 [shape = 'u8[266240]{0}', space=vmem, size = 0x41000, scoped, tag = 'input window, operand 1, single buffered']
    #allocation5 [shape = 's32[1]{0}', space=sflag, size = 0x4, scoped, tag = 'scoped memory for tpu_custom_call.1']
    %7 = vsyncpa [#allocation3], 0
    %8 = vsyncpa [#allocation5], 0
    // Predicated region
    $region2: #{tpu_custom_call.1} parent=1 // pred_check
      _
    $region3: #{tpu_custom_call.1} parent=1 // pred_check_branch
      %10 = sbr.rel (0) target = $region5
    $region4: #{tpu_custom_call.1} parent=1 // pred_region
      %s12 = ssub.s32 128, 128
      %13 = vsyncadd [#allocation3], %s12
      %s15 = sshll.u32 [#allocation2], 4
      %s16 = int_to_ptr.vmem [resolvable:$true] %s15
      %18 = dma.hbm_to_vmem [thread:$0]  %s0, 128, %s16, [#allocation3]
    $region5: #{tpu_custom_call.1} parent=1 // pred_fallthru
      _
    // Predicated region
    $region6: #{tpu_custom_call.1} parent=1 // pred_check
      _
    $region7: #{tpu_custom_call.1} parent=1 // pred_check_branch
      %20 = sbr.rel (0) target = $region9
    $region8: #{tpu_custom_call.1} parent=1 // pred_region
      %s22 = ssub.s32 8320, 8320
      %23 = vsyncadd [#allocation5], %s22
      %s24 = sshll.u32 [#allocation4], 4
      %s25 = int_to_ptr.vmem [resolvable:$true] %s24
      %30 = dma.hbm_to_vmem [thread:$0]  %s1, 8320, %s25, [#allocation5], 128, 128, 8
    $region9: #{tpu_custom_call.1} parent=1 // pred_fallthru
      _
    // Predicated region
    $region10: #{tpu_custom_call.1} parent=1 // pred_check
      _
    $region11: #{tpu_custom_call.1} parent=1 // pred_check_branch
      %32 = sbr.rel (0) target = $region13
    $region12: #{tpu_custom_call.1} parent=1 // pred_region
      %33 = dma.done [#allocation3], 128
    $region13: #{tpu_custom_call.1} parent=1 // pred_fallthru
      _
    // Predicated region
    $region14: #{tpu_custom_call.1} parent=1 // pred_check
      _
    $region15: #{tpu_custom_call.1} parent=1 // pred_check_branch
      %35 = sbr.rel (0) target = $region17
    $region16: #{tpu_custom_call.1} parent=1 // pred_region
      %36 = dma.done [#allocation5], 8320
    $region17: #{tpu_custom_call.1} parent=1 // pred_fallthru
      _
    %v38 = vld [vmem:[#allocation4 + $0x200] sm:$0xff]
    %v39 = vld [vmem:[#allocation2] sm:$0xff]
    %v40 = vld [vmem:[#allocation4] sm:$0xff]
    %v41 = vpack.c.bf16 %v39, %v39
    %v42 = vpack.c.bf16 %v40, %v40
    %v43 = vlaneseq
    %v44 = vshrl.u32 %v43, 7
    %v45 = vsub.s32 0, %v44
    %v46 = vrot.slane %v38, %v45
    %vm47 = vcmask 64512
    %v49 = vsel %vm47, %v41, 0
    %vm51 = vcmask 1043456
    %v53 = vsel %vm51, %v42, 0
    %55 = vmatprep.subr.bf16.mxu0 0
    %56 = vmatpush1.bf16.msra.mxu0 %v53
    %57 = vmatprep.subr.bf16.mxu0 0
    %58 = vmatpush1.bf16.msra.mxu0 0
    %59 = vmatprep.subr.bf16.mxu0 0
    %60 = vmatpush1.bf16.msra.mxu0 0
    %61 = vmatprep.subr.bf16.mxu0 0
    %62 = vmatpush1.bf16.msra.mxu0 0
    %63 = vmatprep.subr.bf16.mxu0 0
    %64 = vmatpush1.bf16.msra.mxu0 0
    %65 = vmatprep.subr.bf16.mxu0 0
    %66 = vmatpush1.bf16.msra.mxu0 0
    %67 = vmatprep.subr.bf16.mxu0 0
    %68 = vmatpush1.bf16.msra.mxu0 0
    %69 = vmatprep.subr.bf16.mxu0 0
    %70 = vmatpush1.bf16.msra.mxu0 0
    %71 = vmatprep.subr.bf16.mxu0 0
    %72 = vmatpush1.bf16.msra.mxu0 0
    %73 = vmatprep.subr.bf16.mxu0 0
    %74 = vmatpush1.bf16.msra.mxu0 0
    %75 = vmatprep.subr.bf16.mxu0 0
    %76 = vmatpush1.bf16.msra.mxu0 0
    %77 = vmatprep.subr.bf16.mxu0 0
    %78 = vmatpush1.bf16.msra.mxu0 0
    %79 = vmatprep.subr.bf16.mxu0 0
    %80 = vmatpush1.bf16.msra.mxu0 0
    %81 = vmatprep.subr.bf16.mxu0 0
    %82 = vmatpush1.bf16.msra.mxu0 0
    %83 = vmatprep.subr.bf16.mxu0 0
    %84 = vmatpush1.bf16.msra.mxu0 0
    %85 = vmatprep.subr.bf16.mxu0 0
    %86 = vmatpush1.bf16.msra.mxu0 0
    %87 = vmatprep.mubr.bf16.mxu0 0
    %88 = vmatmul.mubr.bf16.gmra.mrb[0].mxu0 %v49
    %v89 = vpop.f32.mrb[0].mxu0
    %v90 = vadd.f32 %v46, %v89
    %v91 = vpop.f32.mrb[0].mxu0
    %v92 = vpop.f32.mrb[0].mxu0
    %v93 = vpop.f32.mrb[0].mxu0
    %94 = vdwg.mxu0
    %v95 = vmax.f32 %v90, 0.0
    %v96 = vld [vmem:[#allocation4 + $0x80] sm:$0xff]
    %v97 = vld [vmem:[#allocation4 + $0x88] sm:$0xff]
    %v98 = vld [vmem:[#allocation4 + $0x90] sm:$0xff]
    %v99 = vld [vmem:[#allocation4 + $0x98] sm:$0xff]
    %v100 = vld [vmem:[#allocation4 + $0xa0] sm:$0xff]
    %v101 = vld [vmem:[#allocation4 + $0xa8] sm:$0xff]
    %v102 = vld [vmem:[#allocation4 + $0xb0] sm:$0xff]
    %v103 = vld [vmem:[#allocation4 + $0xb8] sm:$0xff]
    %v104 = vld [vmem:[#allocation4 + $0xc0] sm:$0xff]
    %v105 = vld [vmem:[#allocation4 + $0xc8] sm:$0xff]
    %v106 = vld [vmem:[#allocation4 + $0xd0] sm:$0xff]
    %v107 = vld [vmem:[#allocation4 + $0xd8] sm:$0xff]
    %v108 = vld [vmem:[#allocation4 + $0xe0] sm:$0xff]
    %v109 = vld [vmem:[#allocation4 + $0xe8] sm:$0xff]
    %v110 = vld [vmem:[#allocation4 + $0xf0] sm:$0xff]
    %v111 = vld [vmem:[#allocation4 + $0xf8] sm:$0xff]
    %v112 = vpack.c.bf16 %v95, %v95
    %v113 = vpack.c.bf16 %v97, %v96
    %v114 = vpack.c.bf16 %v99, %v98
    %v115 = vpack.c.bf16 %v101, %v100
    %v116 = vpack.c.bf16 %v103, %v102
    %v117 = vpack.c.bf16 %v105, %v104
    %v118 = vpack.c.bf16 %v107, %v106
    %v119 = vpack.c.bf16 %v109, %v108
    %v120 = vpack.c.bf16 %v111, %v110
    %v121 = vlaneseq
    %v122 = vshrl.u32 %v121, 7
    %v123 = vsub.s32 1, %v122
    %v124 = vrot.slane %v38, %v123
    %125 = vmatprep.subr.bf16.mxu0 0
    %126 = vmatpush1.bf16.msra.mxu0 %v113
    %127 = vmatprep.subr.bf16.mxu0 0
    %128 = vmatpush1.bf16.msra.mxu0 %v114
    %129 = vmatprep.subr.bf16.mxu0 0
    %130 = vmatpush1.bf16.msra.mxu0 %v115
    %131 = vmatprep.subr.bf16.mxu0 0
    %132 = vmatpush1.bf16.msra.mxu0 %v116
    %133 = vmatprep.subr.bf16.mxu0 0
    %134 = vmatpush1.bf16.msra.mxu0 %v117
    %135 = vmatprep.subr.bf16.mxu0 0
    %136 = vmatpush1.bf16.msra.mxu0 %v118
    %137 = vmatprep.subr.bf16.mxu0 0
    %138 = vmatpush1.bf16.msra.mxu0 %v119
    %139 = vmatprep.subr.bf16.mxu0 0
    %140 = vmatpush1.bf16.msra.mxu0 %v120
    %141 = vmatprep.subr.bf16.mxu0 0
    %142 = vmatpush1.bf16.msra.mxu0 0
    %143 = vmatprep.subr.bf16.mxu0 0
    %144 = vmatpush1.bf16.msra.mxu0 0
    %145 = vmatprep.subr.bf16.mxu0 0
    %146 = vmatpush1.bf16.msra.mxu0 0
    %147 = vmatprep.subr.bf16.mxu0 0
    %148 = vmatpush1.bf16.msra.mxu0 0
    %149 = vmatprep.subr.bf16.mxu0 0
    %150 = vmatpush1.bf16.msra.mxu0 0
    %151 = vmatprep.subr.bf16.mxu0 0
    %152 = vmatpush1.bf16.msra.mxu0 0
    %153 = vmatprep.subr.bf16.mxu0 0
    %154 = vmatpush1.bf16.msra.mxu0 0
    %155 = vmatprep.subr.bf16.mxu0 0
    %156 = vmatpush1.bf16.msra.mxu0 0
    %157 = vmatprep.mubr.bf16.mxu0 0
    %158 = vmatmul.mubr.bf16.gmra.mrb[0].mxu0 %v112
    %v159 = vpop.f32.mrb[0].mxu0
    %v160 = vadd.f32 %v124, %v159
    %v161 = vpop.f32.mrb[0].mxu0
    %v162 = vpop.f32.mrb[0].mxu0
    %v163 = vpop.f32.mrb[0].mxu0
    %164 = vdwg.mxu0
    %v165 = vmax.f32 %v160, 0.0
    %v166 = vld [vmem:[#allocation4 + $0x100] sm:$0xff]
    %v167 = vld [vmem:[#allocation4 + $0x108] sm:$0xff]
    %v168 = vld [vmem:[#allocation4 + $0x110] sm:$0xff]
    %v169 = vld [vmem:[#allocation4 + $0x118] sm:$0xff]
    %v170 = vld [vmem:[#allocation4 + $0x120] sm:$0xff]
    %v171 = vld [vmem:[#allocation4 + $0x128] sm:$0xff]
    %v172 = vld [vmem:[#allocation4 + $0x130] sm:$0xff]
    %v173 = vld [vmem:[#allocation4 + $0x138] sm:$0xff]
    %v174 = vld [vmem:[#allocation4 + $0x140] sm:$0xff]
    %v175 = vld [vmem:[#allocation4 + $0x148] sm:$0xff]
    %v176 = vld [vmem:[#allocation4 + $0x150] sm:$0xff]
    %v177 = vld [vmem:[#allocation4 + $0x158] sm:$0xff]
    %v178 = vld [vmem:[#allocation4 + $0x160] sm:$0xff]
    %v179 = vld [vmem:[#allocation4 + $0x168] sm:$0xff]
    %v180 = vld [vmem:[#allocation4 + $0x170] sm:$0xff]
    %v181 = vld [vmem:[#allocation4 + $0x178] sm:$0xff]
    %v182 = vpack.c.bf16 %v165, %v165
    %v183 = vpack.c.bf16 %v167, %v166
    %v184 = vpack.c.bf16 %v169, %v168
    %v185 = vpack.c.bf16 %v171, %v170
    %v186 = vpack.c.bf16 %v173, %v172
    %v187 = vpack.c.bf16 %v175, %v174
    %v188 = vpack.c.bf16 %v177, %v176
    %v189 = vpack.c.bf16 %v179, %v178
    %v190 = vpack.c.bf16 %v181, %v180
    %v191 = vlaneseq
    %v192 = vshrl.u32 %v191, 7
    %v193 = vsub.s32 2, %v192
    %v194 = vrot.slane %v38, %v193
    %195 = vmatprep.subr.bf16.mxu0 0
    %196 = vmatpush1.bf16.msra.mxu0 %v183
    %197 = vmatprep.subr.bf16.mxu0 0
    %198 = vmatpush1.bf16.msra.mxu0 %v184
    %199 = vmatprep.subr.bf16.mxu0 0
    %200 = vmatpush1.bf16.msra.mxu0 %v185
    %201 = vmatprep.subr.bf16.mxu0 0
    %202 = vmatpush1.bf16.msra.mxu0 %v186
    %203 = vmatprep.subr.bf16.mxu0 0
    %204 = vmatpush1.bf16.msra.mxu0 %v187
    %205 = vmatprep.subr.bf16.mxu0 0
    %206 = vmatpush1.bf16.msra.mxu0 %v188
    %207 = vmatprep.subr.bf16.mxu0 0
    %208 = vmatpush1.bf16.msra.mxu0 %v189
    %209 = vmatprep.subr.bf16.mxu0 0
    %210 = vmatpush1.bf16.msra.mxu0 %v190
    %211 = vmatprep.subr.bf16.mxu0 0
    %212 = vmatpush1.bf16.msra.mxu0 0
    %213 = vmatprep.subr.bf16.mxu0 0
    %214 = vmatpush1.bf16.msra.mxu0 0
    %215 = vmatprep.subr.bf16.mxu0 0
    %216 = vmatpush1.bf16.msra.mxu0 0
    %217 = vmatprep.subr.bf16.mxu0 0
    %218 = vmatpush1.bf16.msra.mxu0 0
    %219 = vmatprep.subr.bf16.mxu0 0
    %220 = vmatpush1.bf16.msra.mxu0 0
    %221 = vmatprep.subr.bf16.mxu0 0
    %222 = vmatpush1.bf16.msra.mxu0 0
    %223 = vmatprep.subr.bf16.mxu0 0
    %224 = vmatpush1.bf16.msra.mxu0 0
    %225 = vmatprep.subr.bf16.mxu0 0
    %226 = vmatpush1.bf16.msra.mxu0 0
    %227 = vmatprep.mubr.bf16.mxu0 0
    %228 = vmatmul.mubr.bf16.gmra.mrb[0].mxu0 %v182
    %v229 = vpop.f32.mrb[0].mxu0
    %v230 = vadd.f32 %v194, %v229
    %v231 = vpop.f32.mrb[0].mxu0
    %v232 = vpop.f32.mrb[0].mxu0
    %v233 = vpop.f32.mrb[0].mxu0
    %234 = vdwg.mxu0
    %v235 = vmax.f32 %v230, 0.0
    %v236 = vld [vmem:[#allocation4 + $0x180] sm:$0xff]
    %v237 = vld [vmem:[#allocation4 + $0x188] sm:$0xff]
    %v238 = vld [vmem:[#allocation4 + $0x190] sm:$0xff]
    %v239 = vld [vmem:[#allocation4 + $0x198] sm:$0xff]
    %v240 = vld [vmem:[#allocation4 + $0x1a0] sm:$0xff]
    %v241 = vld [vmem:[#allocation4 + $0x1a8] sm:$0xff]
    %v242 = vld [vmem:[#allocation4 + $0x1b0] sm:$0xff]
    %v243 = vld [vmem:[#allocation4 + $0x1b8] sm:$0xff]
    %v244 = vld [vmem:[#allocation4 + $0x1c0] sm:$0xff]
    %v245 = vld [vmem:[#allocation4 + $0x1c8] sm:$0xff]
    %v246 = vld [vmem:[#allocation4 + $0x1d0] sm:$0xff]
    %v247 = vld [vmem:[#allocation4 + $0x1d8] sm:$0xff]
    %v248 = vld [vmem:[#allocation4 + $0x1e0] sm:$0xff]
    %v249 = vld [vmem:[#allocation4 + $0x1e8] sm:$0xff]
    %v250 = vld [vmem:[#allocation4 + $0x1f0] sm:$0xff]
    %v251 = vld [vmem:[#allocation4 + $0x1f8] sm:$0xff]
    %v252 = vpack.c.bf16 %v235, %v235
    %v253 = vpack.c.bf16 %v237, %v236
    %v254 = vpack.c.bf16 %v239, %v238
    %v255 = vpack.c.bf16 %v241, %v240
    %v256 = vpack.c.bf16 %v243, %v242
    %v257 = vpack.c.bf16 %v245, %v244
    %v258 = vpack.c.bf16 %v247, %v246
    %v259 = vpack.c.bf16 %v249, %v248
    %v260 = vpack.c.bf16 %v251, %v250
    %v261 = vlaneseq
    %v262 = vshrl.u32 %v261, 7
    %v263 = vsub.s32 3, %v262
    %v264 = vrot.slane %v38, %v263
    %265 = vmatprep.subr.bf16.mxu0 0
    %266 = vmatpush1.bf16.msra.mxu0 %v253
    %267 = vmatprep.subr.bf16.mxu0 0
    %268 = vmatpush1.bf16.msra.mxu0 %v254
    %269 = vmatprep.subr.bf16.mxu0 0
    %270 = vmatpush1.bf16.msra.mxu0 %v255
    %271 = vmatprep.subr.bf16.mxu0 0
    %272 = vmatpush1.bf16.msra.mxu0 %v256
    %273 = vmatprep.subr.bf16.mxu0 0
    %274 = vmatpush1.bf16.msra.mxu0 %v257
    %275 = vmatprep.subr.bf16.mxu0 0
    %276 = vmatpush1.bf16.msra.mxu0 %v258
    %277 = vmatprep.subr.bf16.mxu0 0
    %278 = vmatpush1.bf16.msra.mxu0 %v259
    %279 = vmatprep.subr.bf16.mxu0 0
    %280 = vmatpush1.bf16.msra.mxu0 %v260
    %281 = vmatprep.subr.bf16.mxu0 0
    %282 = vmatpush1.bf16.msra.mxu0 0
    %283 = vmatprep.subr.bf16.mxu0 0
    %284 = vmatpush1.bf16.msra.mxu0 0
    %285 = vmatprep.subr.bf16.mxu0 0
    %286 = vmatpush1.bf16.msra.mxu0 0
    %287 = vmatprep.subr.bf16.mxu0 0
    %288 = vmatpush1.bf16.msra.mxu0 0
    %289 = vmatprep.subr.bf16.mxu0 0
    %290 = vmatpush1.bf16.msra.mxu0 0
    %291 = vmatprep.subr.bf16.mxu0 0
    %292 = vmatpush1.bf16.msra.mxu0 0
    %293 = vmatprep.subr.bf16.mxu0 0
    %294 = vmatpush1.bf16.msra.mxu0 0
    %295 = vmatprep.subr.bf16.mxu0 0
    %296 = vmatpush1.bf16.msra.mxu0 0
    %297 = vmatprep.mubr.bf16.mxu0 0
    %298 = vmatmul.mubr.bf16.gmra.mrb[0].mxu0 %v252
    %v299 = vpop.f32.mrb[0].mxu0
    %v300 = vadd.f32 %v264, %v299
    %v301 = vpop.f32.mrb[0].mxu0
    %v302 = vpop.f32.mrb[0].mxu0
    %v303 = vpop.f32.mrb[0].mxu0
    %304 = vdwg.mxu0
    %vm305 = vcmask 31744
    %v306 = vsel %vm305, %v300, -inf
    %307 = vmax.xlane.f32.xlu0 %v306
    %v308 = vpop.xlane.xlu0 %307
    %v309 = vsub.f32 %v300, %v308
    %v310 = vmul.f32 %v309, 1.442695
    %v311 = vpow.pop %v310
    %v312 = vsel %vm305, %v311, 0.0
    %313 = vadd.xlane.f32.xlu0 %v312
    %v314 = vpop.xlane.xlu0 %313
    %v315 = vrcp.pop %v314
    %v316 = vmul.f32 %v311, %v315
    %317 = vst.msk [vmem:[%s2] sm:$0xff] %vm305, %v316
    // Predicated region
    $region18: #{tpu_custom_call.1} parent=1 // pred_check
      _
    $region19: #{tpu_custom_call.1} parent=1 // pred_check_branch
      %319 = sbr.rel (0) target = $region21
    $region20: #{tpu_custom_call.1} parent=1 // pred_region
      _
    $region21: #{tpu_custom_call.1} parent=1 // pred_fallthru
      _
    // Predicated region
    $region22: #{tpu_custom_call.1} parent=1 // pred_check
      _
    $region23: #{tpu_custom_call.1} parent=1 // pred_check_branch
      %321 = sbr.rel (0) target = $region25
    $region24: #{tpu_custom_call.1} parent=1 // pred_region
      _
    $region25: #{tpu_custom_call.1} parent=1 // pred_fallthru
      _
    %322 = vsyncpa [#allocation3], 1
    %323 = vsyncpa [#allocation5], 1

</llo_original>
